<compile_context>
chip_gen: v7x
topology: tpu7x:2x2x1
jax: 0.10.0
libtpu: 0.0.40
codegen_flags: <defaults>
</compile_context>

<pallas_src>
import jax
import jax.numpy as jnp
from jax.experimental import pallas as pl
from jax.experimental.pallas import tpu as pltpu


def _round_up(x, m):
    return ((x + m - 1) // m) * m


# ---------------------------------------------------------------------------
# Pallas kernel: fused (1x1conv -> BN -> ReLU) x2 -> 1x1conv, channel-major.
# ---------------------------------------------------------------------------
def _operation_net_kernel(x_ref, w1_ref, t1_ref, w2_ref, t2_ref, w3_ref, b3_ref,
                          o_ref):
    # x_ref : (C_in, tn) f32      w*_ref : bf16 folded weights
    # t*_ref: (C_hid, 1) f32      b3_ref : (C_out_pad, 1) f32
    # o_ref : (C_out_pad, tn) f32
    x = x_ref[...].astype(jnp.bfloat16)                        # in-kernel bf16 cast

    # conv1 (256 -> 128) with BN1 scale folded into rows + shift + relu
    h1 = jnp.dot(w1_ref[...], x, preferred_element_type=jnp.float32)
    h1 = jnp.maximum(h1 + t1_ref[...], 0.0).astype(jnp.bfloat16)

    # conv2 (128 -> 128) with BN2 folded + relu
    h2 = jnp.dot(w2_ref[...], h1, preferred_element_type=jnp.float32)
    h2 = jnp.maximum(h2 + t2_ref[...], 0.0).astype(jnp.bfloat16)

    # conv3 (128 -> 3*num_angle, zero-padded to C_out_pad) + bias
    out = jnp.dot(w3_ref[...], h2, preferred_element_type=jnp.float32)
    o_ref[...] = (out + b3_ref[...]).astype(o_ref.dtype)


def _fused_head(x_bcn, w1f, t1, w2f, t2, w3p, b3p, *, tn_cap=2048):
    """x_bcn: (B, C_in, N) -> (B, C_out_pad, N) float32."""
    B, C, N = x_bcn.shape
    c_hid = w1f.shape[0]
    c_out_pad = w3p.shape[0]

    # Large lane tile: either the whole N (legal: equals full dim) or a
    # 128-aligned cap; non-divisible N falls into a padded/masked last block.
    tn = N if N <= tn_cap else tn_cap
    n_tiles = pl.cdiv(N, tn)

    def full(shape):
        return pl.BlockSpec(shape, lambda b, j: (0,) * len(shape))

    return pl.pallas_call(
        _operation_net_kernel,
        out_shape=jax.ShapeDtypeStruct((B, c_out_pad, N), jnp.float32),
        grid_spec=pltpu.PrefetchScalarGridSpec(
            num_scalar_prefetch=0,
            grid=(B, n_tiles),
            in_specs=[
                pl.BlockSpec((None, C, tn), lambda b, j: (b, 0, j)),   # x tile
                full((c_hid, C)),          # W1 (BN1 scale folded)
                full((c_hid, 1)),          # shift1
                full((c_hid, c_hid)),      # W2 (BN2 scale folded)
                full((c_hid, 1)),          # shift2
                full((c_out_pad, c_hid)),  # W3 (row-padded)
                full((c_out_pad, 1)),      # bias3 (padded)
            ],
            out_specs=pl.BlockSpec((None, c_out_pad, tn), lambda b, j: (b, 0, j)),
        ),
        compiler_params=pltpu.CompilerParams(
            dimension_semantics=("parallel", "parallel"),
            vmem_limit_bytes=32 * 1024 * 1024,
        ),
    )(x_bcn, w1f, t1, w2f, t2, w3p, b3p)


# ---------------------------------------------------------------------------
# Module wrapper
# ---------------------------------------------------------------------------
class OperationNetPallas:
    def __init__(self, num_angle, num_depth, key):
        self.num_angle = num_angle
        self.num_depth = num_depth
        eps = 1e-5
        c_in, c_hid = 256, 128
        c_out = 3 * num_angle
        self.c_out_pad = max(_round_up(c_out, 16), 16)

        ks = jax.random.split(key, 6)
        # Conv1d weights stored un-transposed: (out_channels, in_channels)
        w1 = jax.random.normal(ks[0], (c_hid, c_in), jnp.float32) * 0.05
        b1 = jax.random.normal(ks[1], (c_hid,), jnp.float32) * 0.05
        w2 = jax.random.normal(ks[2], (c_hid, c_hid), jnp.float32) * 0.05
        b2 = jax.random.normal(ks[3], (c_hid,), jnp.float32) * 0.05
        w3 = jax.random.normal(ks[4], (c_out, c_hid), jnp.float32) * 0.05
        b3 = jax.random.normal(ks[5], (c_out,), jnp.float32) * 0.05

        # BatchNorm1d(128) inference-mode defaults.
        # TODO(synk): training-mode batch statistics are not implemented; the
        # kernel folds inference running stats (mean=0, var=1, gamma=1, beta=0).
        gamma = jnp.ones((c_hid,), jnp.float32)
        beta = jnp.zeros((c_hid,), jnp.float32)
        mean = jnp.zeros((c_hid,), jnp.float32)
        var = jnp.ones((c_hid,), jnp.float32)

        s1 = gamma * jax.lax.rsqrt(var + eps)
        s2 = gamma * jax.lax.rsqrt(var + eps)

        # Fold BN scale into weight rows; conv bias + BN shift into additive term.
        self.w1f = (w1 * s1[:, None]).astype(jnp.bfloat16)
        self.t1 = (b1 * s1 + beta - mean * s1).reshape(c_hid, 1).astype(jnp.float32)
        self.w2f = (w2 * s2[:, None]).astype(jnp.bfloat16)
        self.t2 = (b2 * s2 + beta - mean * s2).reshape(c_hid, 1).astype(jnp.float32)

        # Pad conv3 output channels to a sublane-aligned count with zeros.
        w3p = jnp.zeros((self.c_out_pad, c_hid), jnp.float32).at[:c_out].set(w3)
        b3p = jnp.zeros((self.c_out_pad,), jnp.float32).at[:c_out].set(b3)
        self.w3p = w3p.astype(jnp.bfloat16)
        self.b3p = b3p.reshape(self.c_out_pad, 1)

    def __call__(self, vp_features, end_points):
        # vp_features: (B, 256, num_seed, num_depth), consumed in native layout.
        B, C, num_seed, num_depth = vp_features.shape
        N = num_seed * num_depth
        x = vp_features.reshape(B, C, N)          # same as torch .view, no copy

        out = _fused_head(x, self.w1f, self.t1, self.w2f, self.t2,
                          self.w3p, self.b3p)     # (B, c_out_pad, N)
        out = out.reshape(B, self.c_out_pad, num_seed, num_depth)

        na = self.num_angle
        end_points['grasp_score_pred'] = out[:, 0:na]
        end_points['grasp_angle_cls_pred'] = out[:, na:2 * na]
        end_points['grasp_width_pred'] = out[:, 2 * na:3 * na]
        return end_points


# ---------------------------------------------------------------------------
# Pure-JAX reference (same bf16/f32-accumulate math) for sanity check
# ---------------------------------------------------------------------------
def _reference(net, vp_features):
    B, C, ns, nd = vp_features.shape
    x = vp_features.reshape(B, C, ns * nd).astype(jnp.bfloat16)
    h1 = jnp.einsum('oc,bcn->bon', net.w1f, x, preferred_element_type=jnp.float32)
    h1 = jnp.maximum(h1 + net.t1[None], 0.0).astype(jnp.bfloat16)
    h2 = jnp.einsum('oc,bcn->bon', net.w2f, h1, preferred_element_type=jnp.float32)
    h2 = jnp.maximum(h2 + net.t2[None], 0.0).astype(jnp.bfloat16)
    o = jnp.einsum('oc,bcn->bon', net.w3p, h2, preferred_element_type=jnp.float32)
    o = o + net.b3p[None]
    return o.reshape(B, -1, ns, nd)


if __name__ == "__main__":
    key = jax.random.PRNGKey(0)
    k_param, k_x = jax.random.split(key)

    num_angle, num_depth = 12, 4
    B, C, num_seed = 2, 256, 16

    net = OperationNetPallas(num_angle, num_depth, k_param)
    vp_features = jax.random.normal(k_x, (B, C, num_seed, num_depth), jnp.float32)

    end_points = net(vp_features, {})
    for v in end_points.values():
        jax.block_until_ready(v)

    # sanity check against pure-JAX reference (same bf16 inputs, f32 accumulate)
    ref = _reference(net, vp_features)
    got = jnp.concatenate([end_points['grasp_score_pred'],
                           end_points['grasp_angle_cls_pred'],
                           end_points['grasp_width_pred']], axis=1)
    assert got.shape == (B, 3 * num_angle, num_seed, num_depth)
    err = float(jnp.max(jnp.abs(got - ref[:, :3 * num_angle])))
    assert err < 1e-2, f"max abs err {err}"

    print("KERNEL_OK")
</pallas_src>

<mosaic_0001>
module attributes {stable_mosaic.version = 11 : i64} {
  func.func @_operation_net_kernel(%arg0: i32, %arg1: i32, %arg2: memref<1x256x64xf32, #tpu.memory_space<vmem>>, %arg3: memref<128x256xbf16, #tpu.memory_space<vmem>>, %arg4: memref<128x1xf32, #tpu.memory_space<vmem>>, %arg5: memref<128x128xbf16, #tpu.memory_space<vmem>>, %arg6: memref<128x1xf32, #tpu.memory_space<vmem>>, %arg7: memref<48x128xbf16, #tpu.memory_space<vmem>>, %arg8: memref<48x1xf32, #tpu.memory_space<vmem>>, %arg9: memref<1x48x64xf32, #tpu.memory_space<vmem>>) attributes {dimension_semantics = [#tpu.dimension_semantics<parallel>, #tpu.dimension_semantics<parallel>], iteration_bounds = array<i64: 2, 1>, scalar_prefetch = 0 : i64, scratch_operands = 0 : i64, tpu.core_type = #tpu.core_type<tc>, window_params = [{transform_indices = @transform_0, window_bounds = array<i64: 1, 256, 64>}, {pipeline_mode = #tpu.pipeline_mode<synchronous>, transform_indices = @transform_1, window_bounds = array<i64: 128, 256>}, {pipeline_mode = #tpu.pipeline_mode<synchronous>, transform_indices = @transform_2, window_bounds = array<i64: 128, 1>}, {pipeline_mode = #tpu.pipeline_mode<synchronous>, transform_indices = @transform_3, window_bounds = array<i64: 128, 128>}, {pipeline_mode = #tpu.pipeline_mode<synchronous>, transform_indices = @transform_4, window_bounds = array<i64: 128, 1>}, {pipeline_mode = #tpu.pipeline_mode<synchronous>, transform_indices = @transform_5, window_bounds = array<i64: 48, 128>}, {pipeline_mode = #tpu.pipeline_mode<synchronous>, transform_indices = @transform_6, window_bounds = array<i64: 48, 1>}, {transform_indices = @transform_7, window_bounds = array<i64: 1, 48, 64>}]} {
    %c0 = arith.constant 0 : index
    %c0_0 = arith.constant 0 : index
    %c0_1 = arith.constant 0 : index
    %0 = vector.load %arg2[%c0, %c0_0, %c0_1] : memref<1x256x64xf32, #tpu.memory_space<vmem>>, vector<1x256x64xf32>
    %1 = vector.shape_cast %0 : vector<1x256x64xf32> to vector<256x64xf32>
    %2 = arith.truncf %1 : vector<256x64xf32> to vector<256x64xbf16>
    %c0_2 = arith.constant 0 : index
    %c0_3 = arith.constant 0 : index
    %3 = vector.load %arg3[%c0_2, %c0_3] : memref<128x256xbf16, #tpu.memory_space<vmem>>, vector<128x256xbf16>
    %cst = arith.constant dense<0.000000e+00> : vector<128x64xf32>
    %4 = tpu.matmul %3, %2, %cst {dimension_numbers = #tpu.dot_dimension_numbers<[1], [0], [0], [1], [0, 0, 1, 1], [], []>} : vector<128x256xbf16>, vector<256x64xbf16>, vector<128x64xf32> -> vector<128x64xf32>
    %c0_4 = arith.constant 0 : index
    %c0_5 = arith.constant 0 : index
    %5 = vector.load %arg4[%c0_4, %c0_5] : memref<128x1xf32, #tpu.memory_space<vmem>>, vector<128x1xf32>
    %6 = vector.broadcast %5 : vector<128x1xf32> to vector<128x64xf32>
    %7 = arith.addf %4, %6 : vector<128x64xf32>
    %cst_6 = arith.constant 0.000000e+00 : f32
    %8 = vector.broadcast %cst_6 : f32 to vector<128x64xf32>
    %9 = arith.maximumf %7, %8 : vector<128x64xf32>
    %10 = arith.truncf %9 : vector<128x64xf32> to vector<128x64xbf16>
    %c0_7 = arith.constant 0 : index
    %c0_8 = arith.constant 0 : index
    %11 = vector.load %arg5[%c0_7, %c0_8] : memref<128x128xbf16, #tpu.memory_space<vmem>>, vector<128x128xbf16>
    %cst_9 = arith.constant dense<0.000000e+00> : vector<128x64xf32>
    %12 = tpu.matmul %11, %10, %cst_9 {dimension_numbers = #tpu.dot_dimension_numbers<[1], [0], [0], [1], [0, 0, 1, 1], [], []>} : vector<128x128xbf16>, vector<128x64xbf16>, vector<128x64xf32> -> vector<128x64xf32>
    %c0_10 = arith.constant 0 : index
    %c0_11 = arith.constant 0 : index
    %13 = vector.load %arg6[%c0_10, %c0_11] : memref<128x1xf32, #tpu.memory_space<vmem>>, vector<128x1xf32>
    %14 = vector.broadcast %13 : vector<128x1xf32> to vector<128x64xf32>
    %15 = arith.addf %12, %14 : vector<128x64xf32>
    %cst_12 = arith.constant 0.000000e+00 : f32
    %16 = vector.broadcast %cst_12 : f32 to vector<128x64xf32>
    %17 = arith.maximumf %15, %16 : vector<128x64xf32>
    %18 = arith.truncf %17 : vector<128x64xf32> to vector<128x64xbf16>
    %c0_13 = arith.constant 0 : index
    %c0_14 = arith.constant 0 : index
    %19 = vector.load %arg7[%c0_13, %c0_14] : memref<48x128xbf16, #tpu.memory_space<vmem>>, vector<48x128xbf16>
    %cst_15 = arith.constant dense<0.000000e+00> : vector<48x64xf32>
    %20 = tpu.matmul %19, %18, %cst_15 {dimension_numbers = #tpu.dot_dimension_numbers<[1], [0], [0], [1], [0, 0, 1, 1], [], []>} : vector<48x128xbf16>, vector<128x64xbf16>, vector<48x64xf32> -> vector<48x64xf32>
    %c0_16 = arith.constant 0 : index
    %c0_17 = arith.constant 0 : index
    %21 = vector.load %arg8[%c0_16, %c0_17] : memref<48x1xf32, #tpu.memory_space<vmem>>, vector<48x1xf32>
    %22 = vector.broadcast %21 : vector<48x1xf32> to vector<48x64xf32>
    %23 = arith.addf %20, %22 : vector<48x64xf32>
    %c0_18 = arith.constant 0 : index
    %c0_19 = arith.constant 0 : index
    %c0_20 = arith.constant 0 : index
    %24 = vector.load %arg9[%c0_18, %c0_19, %c0_20] : memref<1x48x64xf32, #tpu.memory_space<vmem>>, vector<1x48x64xf32>
    %25 = vector.shape_cast %24 : vector<1x48x64xf32> to vector<48x64xf32>
    %26 = vector.shape_cast %23 : vector<48x64xf32> to vector<1x48x64xf32>
    tpu.vector_store %arg9[%c0_18, %c0_19, %c0_20], %26 {strides = array<i32>} : memref<1x48x64xf32, #tpu.memory_space<vmem>>, vector<1x48x64xf32>,
    return
  }
  func.func @transform_0(%arg0: i32, %arg1: i32) -> (i32, i32, i32) {
    %c0_i32 = arith.constant 0 : i32
    %c0_i32_0 = arith.constant 0 : i32
    return %arg0, %c0_i32, %arg1 : i32, i32, i32
  }
  func.func @transform_1(%arg0: i32, %arg1: i32) -> (i32, i32) {
    %c0_i32 = arith.constant 0 : i32
    %c0_i32_0 = arith.constant 0 : i32
    %c0_i32_1 = arith.constant 0 : i32
    return %c0_i32, %c0_i32_0 : i32, i32
  }
  func.func @transform_2(%arg0: i32, %arg1: i32) -> (i32, i32) {
    %c0_i32 = arith.constant 0 : i32
    %c0_i32_0 = arith.constant 0 : i32
    %c0_i32_1 = arith.constant 0 : i32
    return %c0_i32, %c0_i32_0 : i32, i32
  }
  func.func @transform_3(%arg0: i32, %arg1: i32) -> (i32, i32) {
    %c0_i32 = arith.constant 0 : i32
    %c0_i32_0 = arith.constant 0 : i32
    %c0_i32_1 = arith.constant 0 : i32
    return %c0_i32, %c0_i32_0 : i32, i32
  }
  func.func @transform_4(%arg0: i32, %arg1: i32) -> (i32, i32) {
    %c0_i32 = arith.constant 0 : i32
    %c0_i32_0 = arith.constant 0 : i32
    %c0_i32_1 = arith.constant 0 : i32
    return %c0_i32, %c0_i32_0 : i32, i32
  }
  func.func @transform_5(%arg0: i32, %arg1: i32) -> (i32, i32) {
    %c0_i32 = arith.constant 0 : i32
    %c0_i32_0 = arith.constant 0 : i32
    %c0_i32_1 = arith.constant 0 : i32
    return %c0_i32, %c0_i32_0 : i32, i32
  }
  func.func @transform_6(%arg0: i32, %arg1: i32) -> (i32, i32) {
    %c0_i32 = arith.constant 0 : i32
    %c0_i32_0 = arith.constant 0 : i32
    %c0_i32_1 = arith.constant 0 : i32
    return %c0_i32, %c0_i32_0 : i32, i32
  }
  func.func @transform_7(%arg0: i32, %arg1: i32) -> (i32, i32, i32) {
    %c0_i32 = arith.constant 0 : i32
    %c0_i32_0 = arith.constant 0 : i32
    return %arg0, %c0_i32, %arg1 : i32, i32, i32
  }
}

</mosaic_0001>

<llo_original>
// kernel: tpu_custom_call.1
$region0: #{tpu_custom_call.1}
  #allocation0 [shape = 'u32[]', space=smem, size = 0x4, offset = 0x4, fixed_abs, tag = 'smem constant byte address 0x4 - core index']
  #allocation1 [shape = 'u32[144,128]{1,0:T(1,128)}', space=vmem, size = 0x12000, scoped, tag = 'internal scratch']
  %s0 = inlined_call_operand.vmem [shape: f32[2,256,64], index: 0, kind: input, shape index: {}]
  %s1 = inlined_call_operand.vmem [shape: bf16[128,256], index: 1, kind: input, shape index: {}]
  %s2 = inlined_call_operand.vmem [shape: f32[128,1], index: 2, kind: input, shape index: {}]
  %s3 = inlined_call_operand.vmem [shape: bf16[128,128], index: 3, kind: input, shape index: {}]
  %s4 = inlined_call_operand.vmem [shape: f32[128,1], index: 4, kind: input, shape index: {}]
  %s5 = inlined_call_operand.vmem [shape: bf16[48,128], index: 5, kind: input, shape index: {}]
  %s6 = inlined_call_operand.vmem [shape: f32[48,1], index: 6, kind: input, shape index: {}]
  %s7 = inlined_call_operand.hbm [shape: f32[2,48,64], index: 7, kind: output, shape index: {}]
  %s8 = sld [smem:[#allocation0]]
  $region61: #{tpu_custom_call.1} parent=0
    _
  %s10 = ssub.s32 1, %s8
  %s11 = scalar_select 0, %s10, %s8
  $region1: #{tpu_custom_call.1} parent=0
    #allocation2 [shape = 'u8[49152]{0}', space=vmem, size = 0xc000, scoped, tag = 'output window, operand 0']
    #allocation3 [shape = 's32[2]{0}', space=sflag, size = 0x8, scoped, tag = 'scoped memory for tpu_custom_call.1']
    %12 = vsyncpa [#allocation3], 0
    %s13 = scalar_lea.sflag [#allocation3], 1
    %14 = vsyncpa %s13, 0
    loop: start=0, step=1, limit=4
    $region2: #{tpu_custom_call.1} parent=1 // loop_pre_header
      _
    $region3: #{tpu_custom_call.1} parent=1 // loop_header
      %s16 = sphi 0, %s20
      %p17 = scmp.ge.s32.totalorder %s16, 4
      %s23 = sphi 0, %s35
      %s24 = sphi 0, %s31
      %s25 = sphi 0, %s23
      %s26 = sphi 0, %s24
      %s27 = sphi 0, %s25
      %s28 = sphi 0, %s26
      %s40 = sphi 0, %s42
      %s43 = sphi 0, %s40
      %s44 = sphi 0, %s43
      %s60 = sphi 0, %s44
      %s64 = sphi 0, %s64
      %s66 = sphi 0, %s64
      %s67 = sphi 0, %s66
      %s81 = sphi 0, %s67
      %s85 = sphi 0, %s85
      %s87 = sphi 0, %s85
      %s88 = sphi 0, %s87
      %s102 = sphi 0, %s88
      %s106 = sphi 0, %s106
      %s108 = sphi 0, %s106
      %s109 = sphi 0, %s108
      %s123 = sphi 0, %s109
      %s127 = sphi 0, %s127
      %s129 = sphi 0, %s127
      %s130 = sphi 0, %s129
      %s144 = sphi 0, %s130
      %s148 = sphi 0, %s148
      %s150 = sphi 0, %s148
      %s151 = sphi 0, %s150
      %s165 = sphi 0, %s151
      %s169 = sphi 0, %s169
      %s171 = sphi 0, %s169
      %s172 = sphi 0, %s171
      %s186 = sphi 0, %s172
      %s194 = sphi 0, %s196
      %s197 = sphi 0, %s194
      %s198 = sphi 0, %s197
      %s214 = sphi 0, %s198
    $region4: #{tpu_custom_call.1} parent=1 // loop_header_branch
      %19 = sbr.rel (%p17) target = $region8
    $region5: #{tpu_custom_call.1} parent=1 // loop_body
      %s21 = ssub.s32 %s16, 1
      %s22 = ssub.s32 %s16, 2
      %s29 = sadd.s32 1, %s24
      %p30 = scmp.ge.s32.totalorder %s29, 1
      %s31 = scalar_select %p30, 0, %s29
      %s32 = sadd.s32 1, %s23
      %s33 = scalar_select %p30, %s32, %s23
      %p34 = scmp.ge.s32.totalorder %s33, 2
      %s35 = scalar_select %p34, 0, %s33
      %s36 = ssub.s32 %s23, %s35
      %s37 = ssub.s32 %s24, %s31
      %s38 = sor.u32 %s36, %s37
      %p39 = scmp.eq.s32.totalorder %s38, 0
      %s41 = sadd.s32 %s40, 1
      %s42 = scalar_select %p39, %s40, %s41
      %p45 = pneg %p39
      %p46 = scmp.eq.s32.totalorder %s16, 1
      %p47 = por %p45, %p46
      %p48 = scmp.ne.s32.totalorder %s40, %s43
      %p49 = scmp.eq.s32.totalorder %s16, 0
      %p50 = por %p48, %p49
      %p51 = scmp.ne.s32.totalorder %s40, %s43
      %p52 = scmp.eq.s32.totalorder %s21, 1
      %p53 = por %p51, %p52
      %p54 = scmp.ne.s32.totalorder %s43, %s44
      %p55 = scmp.eq.s32.totalorder %s21, 0
      %p56 = por %p54, %p55
      %p57 = scmp.ne.s32.totalorder %s43, %s44
      %p58 = scmp.eq.s32.totalorder %s22, 1
      %p59 = por %p57, %p58
      %p61 = scmp.ne.s32.totalorder %s44, %s60
      %p62 = scmp.eq.s32.totalorder %s22, 0
      %p63 = por %p61, %p62
      %s65 = sadd.s32 %s64, 1
      %p68 = scmp.eq.s32.totalorder %s16, 1
      %p69 = scmp.ne.s32.totalorder %s64, %s66
      %p70 = scmp.eq.s32.totalorder %s16, 0
      %p71 = por %p69, %p70
      %p72 = scmp.ne.s32.totalorder %s64, %s66
      %p73 = scmp.eq.s32.totalorder %s21, 1
      %p74 = por %p72, %p73
      %p75 = scmp.ne.s32.totalorder %s66, %s67
      %p76 = scmp.eq.s32.totalorder %s21, 0
      %p77 = por %p75, %p76
      %p78 = scmp.ne.s32.totalorder %s66, %s67
      %p79 = scmp.eq.s32.totalorder %s22, 1
      %p80 = por %p78, %p79
      %p82 = scmp.ne.s32.totalorder %s67, %s81
      %p83 = scmp.eq.s32.totalorder %s22, 0
      %p84 = por %p82, %p83
      %s86 = sadd.s32 %s85, 1
      %p89 = scmp.eq.s32.totalorder %s16, 1
      %p90 = scmp.ne.s32.totalorder %s85, %s87
      %p91 = scmp.eq.s32.totalorder %s16, 0
      %p92 = por %p90, %p91
      %p93 = scmp.ne.s32.totalorder %s85, %s87
      %p94 = scmp.eq.s32.totalorder %s21, 1
      %p95 = por %p93, %p94
      %p96 = scmp.ne.s32.totalorder %s87, %s88
      %p97 = scmp.eq.s32.totalorder %s21, 0
      %p98 = por %p96, %p97
      %p99 = scmp.ne.s32.totalorder %s87, %s88
      %p100 = scmp.eq.s32.totalorder %s22, 1
      %p101 = por %p99, %p100
      %p103 = scmp.ne.s32.totalorder %s88, %s102
      %p104 = scmp.eq.s32.totalorder %s22, 0
      %p105 = por %p103, %p104
      %s107 = sadd.s32 %s106, 1
      %p110 = scmp.eq.s32.totalorder %s16, 1
      %p111 = scmp.ne.s32.totalorder %s106, %s108
      %p112 = scmp.eq.s32.totalorder %s16, 0
      %p113 = por %p111, %p112
      %p114 = scmp.ne.s32.totalorder %s106, %s108
      %p115 = scmp.eq.s32.totalorder %s21, 1
      %p116 = por %p114, %p115
      %p117 = scmp.ne.s32.totalorder %s108, %s109
      %p118 = scmp.eq.s32.totalorder %s21, 0
      %p119 = por %p117, %p118
      %p120 = scmp.ne.s32.totalorder %s108, %s109
      %p121 = scmp.eq.s32.totalorder %s22, 1
      %p122 = por %p120, %p121
      %p124 = scmp.ne.s32.totalorder %s109, %s123
      %p125 = scmp.eq.s32.totalorder %s22, 0
      %p126 = por %p124, %p125
      %s128 = sadd.s32 %s127, 1
      %p131 = scmp.eq.s32.totalorder %s16, 1
      %p132 = scmp.ne.s32.totalorder %s127, %s129
      %p133 = scmp.eq.s32.totalorder %s16, 0
      %p134 = por %p132, %p133
      %p135 = scmp.ne.s32.totalorder %s127, %s129
      %p136 = scmp.eq.s32.totalorder %s21, 1
      %p137 = por %p135, %p136
      %p138 = scmp.ne.s32.totalorder %s129, %s130
      %p139 = scmp.eq.s32.totalorder %s21, 0
      %p140 = por %p138, %p139
      %p141 = scmp.ne.s32.totalorder %s129, %s130
      %p142 = scmp.eq.s32.totalorder %s22, 1
      %p143 = por %p141, %p142
      %p145 = scmp.ne.s32.totalorder %s130, %s144
      %p146 = scmp.eq.s32.totalorder %s22, 0
      %p147 = por %p145, %p146
      %s149 = sadd.s32 %s148, 1
      %p152 = scmp.eq.s32.totalorder %s16, 1
      %p153 = scmp.ne.s32.totalorder %s148, %s150
      %p154 = scmp.eq.s32.totalorder %s16, 0
      %p155 = por %p153, %p154
      %p156 = scmp.ne.s32.totalorder %s148, %s150
      %p157 = scmp.eq.s32.totalorder %s21, 1
      %p158 = por %p156, %p157
      %p159 = scmp.ne.s32.totalorder %s150, %s151
      %p160 = scmp.eq.s32.totalorder %s21, 0
      %p161 = por %p159, %p160
      %p162 = scmp.ne.s32.totalorder %s150, %s151
      %p163 = scmp.eq.s32.totalorder %s22, 1
      %p164 = por %p162, %p163
      %p166 = scmp.ne.s32.totalorder %s151, %s165
      %p167 = scmp.eq.s32.totalorder %s22, 0
      %p168 = por %p166, %p167
      %s170 = sadd.s32 %s169, 1
      %p173 = scmp.eq.s32.totalorder %s16, 1
      %p174 = scmp.ne.s32.totalorder %s169, %s171
      %p175 = scmp.eq.s32.totalorder %s16, 0
      %p176 = por %p174, %p175
      %p177 = scmp.ne.s32.totalorder %s169, %s171
      %p178 = scmp.eq.s32.totalorder %s21, 1
      %p179 = por %p177, %p178
      %p180 = scmp.ne.s32.totalorder %s171, %s172
      %p181 = scmp.eq.s32.totalorder %s21, 0
      %p182 = por %p180, %p181
      %p183 = scmp.ne.s32.totalorder %s171, %s172
      %p184 = scmp.eq.s32.totalorder %s22, 1
      %p185 = por %p183, %p184
      %p187 = scmp.ne.s32.totalorder %s172, %s186
      %p188 = scmp.eq.s32.totalorder %s22, 0
      %p189 = por %p187, %p188
      %s190 = ssub.s32 %s23, %s35
      %s191 = ssub.s32 %s24, %s31
      %s192 = sor.u32 %s190, %s191
      %p193 = scmp.eq.s32.totalorder %s192, 0
      %s195 = sadd.s32 %s194, 1
      %s196 = scalar_select %p193, %s194, %s195
      %p199 = pneg %p193
      %p200 = scmp.eq.s32.totalorder %s16, 1
      %p201 = por %p199, %p200
      %p202 = scmp.ne.s32.totalorder %s194, %s197
      %p203 = scmp.eq.s32.totalorder %s16, 0
      %p204 = por %p202, %p203
      %p205 = scmp.ne.s32.totalorder %s194, %s197
      %p206 = scmp.eq.s32.totalorder %s21, 1
      %p207 = por %p205, %p206
      %p208 = scmp.ne.s32.totalorder %s197, %s198
      %p209 = scmp.eq.s32.totalorder %s21, 0
      %p210 = por %p208, %p209
      %p211 = scmp.ne.s32.totalorder %s197, %s198
      %p212 = scmp.eq.s32.totalorder %s22, 1
      %p213 = por %p211, %p212
      %p215 = scmp.ne.s32.totalorder %s198, %s214
      %p216 = scmp.eq.s32.totalorder %s22, 0
      %p217 = por %p215, %p216
      %p218 = scmp.le.s32.totalorder 1, %s16
      %p219 = scmp.lt.s32.totalorder %s16, 3
      %p220 = pnand %p218, %p219
      %p221 = pneg %p220
      // Predicated region
      $region9: #{tpu_custom_call.1} parent=5 // pred_check
        _
      $region10: #{tpu_custom_call.1} parent=5 // pred_check_branch
        %223 = sbr.rel (%p220) target = $region12
      $region11: #{tpu_custom_call.1} parent=5 // pred_region
        %s224 = ssub.s32 %s16, 1
        // Predicated region
        $region13: #{tpu_custom_call.1} parent=11 // pred_check
          %p225 = pneg %p77
        $region14: #{tpu_custom_call.1} parent=11 // pred_check_branch
          %227 = sbr.rel (%p225) target = $region16
        $region15: #{tpu_custom_call.1} parent=11 // pred_region
          _
        $region16: #{tpu_custom_call.1} parent=11 // pred_fallthru
          _
        // Predicated region
        $region17: #{tpu_custom_call.1} parent=11 // pred_check
          %p228 = pneg %p98
        $region18: #{tpu_custom_call.1} parent=11 // pred_check_branch
          %230 = sbr.rel (%p228) target = $region20
        $region19: #{tpu_custom_call.1} parent=11 // pred_region
          _
        $region20: #{tpu_custom_call.1} parent=11 // pred_fallthru
          _
        // Predicated region
        $region21: #{tpu_custom_call.1} parent=11 // pred_check
          %p231 = pneg %p119
        $region22: #{tpu_custom_call.1} parent=11 // pred_check_branch
          %233 = sbr.rel (%p231) target = $region24
        $region23: #{tpu_custom_call.1} parent=11 // pred_region
          _
        $region24: #{tpu_custom_call.1} parent=11 // pred_fallthru
          _
        // Predicated region
        $region25: #{tpu_custom_call.1} parent=11 // pred_check
          %p234 = pneg %p140
        $region26: #{tpu_custom_call.1} parent=11 // pred_check_branch
          %236 = sbr.rel (%p234) target = $region28
        $region27: #{tpu_custom_call.1} parent=11 // pred_region
          _
        $region28: #{tpu_custom_call.1} parent=11 // pred_fallthru
          _
        // Predicated region
        $region29: #{tpu_custom_call.1} parent=11 // pred_check
          %p237 = pneg %p161
        $region30: #{tpu_custom_call.1} parent=11 // pred_check_branch
          %239 = sbr.rel (%p237) target = $region32
        $region31: #{tpu_custom_call.1} parent=11 // pred_region
          _
        $region32: #{tpu_custom_call.1} parent=11 // pred_fallthru
          _
        // Predicated region
        $region33: #{tpu_custom_call.1} parent=11 // pred_check
          %p240 = pneg %p182
        $region34: #{tpu_custom_call.1} parent=11 // pred_check_branch
          %242 = sbr.rel (%p240) target = $region36
        $region35: #{tpu_custom_call.1} parent=11 // pred_region
          _
        $region36: #{tpu_custom_call.1} parent=11 // pred_fallthru
          _
      $region12: #{tpu_custom_call.1} parent=5 // pred_fallthru
        _
      %p243 = scmp.lt.s32.totalorder %s16, 2
      // Predicated region
      $region37: #{tpu_custom_call.1} parent=5 // pred_check
        %p244 = pneg %p243
      $region38: #{tpu_custom_call.1} parent=5 // pred_check_branch
        %246 = sbr.rel (%p244) target = $region40
      $region39: #{tpu_custom_call.1} parent=5 // pred_region
        // Predicated region
        $region41: #{tpu_custom_call.1} parent=39 // pred_check
          %p247 = pneg %p50
        $region42: #{tpu_custom_call.1} parent=39 // pred_check_branch
          %249 = sbr.rel (%p247) target = $region44
        $region43: #{tpu_custom_call.1} parent=39 // pred_region
          %p250 = scmp.lt.s32.totalorder %s23, 1
          %s251 = scalar_select %p250, %s23, 1
          %p252 = scmp.lt.s32.totalorder %s24, 0
          %s253 = scalar_select %p252, %s24, 0
          %s254 = smul.addr %s251, 32
          %s255 = sadd.s32 %s253, %s254
          %s256 = smul.addr %s255, 8
          %s257 = scalar_lea.vmem %s0, %s256
        $region44: #{tpu_custom_call.1} parent=39 // pred_fallthru
          _
      $region40: #{tpu_custom_call.1} parent=5 // pred_fallthru
        _
      %p258 = scmp.le.s32.totalorder 1, %s16
      %p259 = scmp.lt.s32.totalorder %s16, 3
      %p260 = pnand %p258, %p259
      %p261 = pneg %p260
      // Predicated region
      $region45: #{tpu_custom_call.1} parent=5 // pred_check
        _
      $region46: #{tpu_custom_call.1} parent=5 // pred_check_branch
        %263 = sbr.rel (%p260) target = $region48
      $region47: #{tpu_custom_call.1} parent=5 // pred_region
        %s264 = ssub.s32 %s16, 1
        %p265 = scmp.lt.s32.totalorder %s25, 1
        %s266 = scalar_select %p265, %s25, 1
        %p267 = scmp.lt.s32.totalorder %s26, 0
        %s268 = scalar_select %p267, %s26, 0
        %s269 = smul.addr %s266, 32
        %s270 = sadd.s32 %s268, %s269
        %s271 = smul.addr %s270, 8
        %s272 = scalar_lea.vmem %s0, %s271
        %p273 = pneg %p56
        %p274 = pneg %p53
        %p275 = pneg %p77
        %p276 = pneg %p74
        %p277 = pneg %p98
        %p278 = pneg %p95
        %p279 = pneg %p119
        %p280 = pneg %p116
        %p281 = pneg %p140
        %p282 = pneg %p137
        %p283 = pneg %p161
        %p284 = pneg %p158
        %p285 = pneg %p182
        %p286 = pneg %p179
        %p287 = pneg %p210
        %p288 = pneg %p207
        %s289 = sand.u32 %s197, 1
        %s290 = scalar_lea.sflag [#allocation3], %s289
        %s291 = sand.u32 %s197, 1
        %s292 = smul.addr %s291, 48
        %s293 = scalar_lea.vmem [#allocation2], %s292
        %p294 = scmp.lt.s32.totalorder %s25, 1
        %s295 = scalar_select %p294, %s25, 1
        %p296 = scmp.lt.s32.totalorder %s26, 0
        %s297 = scalar_select %p296, %s26, 0
        %s298 = smul.addr %s295, 32
        %s299 = sadd.s32 %s297, %s298
        %s300 = smul.addr %s299, 8
        %s301 = scalar_lea.vmem %s0, %s300
        %v303 = vld [vmem:[%s301] sm:$0xff]
        %v304 = vld [vmem:[%s301 + $0x8] sm:$0xff]
        %v305 = vld [vmem:[%s301 + $0x10] sm:$0xff]
        %v306 = vld [vmem:[%s301 + $0x18] sm:$0xff]
        %v307 = vld [vmem:[%s301 + $0x20] sm:$0xff]
        %v308 = vld [vmem:[%s301 + $0x28] sm:$0xff]
        %v309 = vld [vmem:[%s301 + $0x30] sm:$0xff]
        %v310 = vld [vmem:[%s301 + $0x38] sm:$0xff]
        %v311 = vld [vmem:[%s301 + $0x40] sm:$0xff]
        %v312 = vld [vmem:[%s301 + $0x48] sm:$0xff]
        %v313 = vld [vmem:[%s301 + $0x50] sm:$0xff]
        %v314 = vld [vmem:[%s301 + $0x58] sm:$0xff]
        %v315 = vld [vmem:[%s301 + $0x60] sm:$0xff]
        %v316 = vld [vmem:[%s301 + $0x68] sm:$0xff]
        %v317 = vld [vmem:[%s301 + $0x70] sm:$0xff]
        %v318 = vld [vmem:[%s301 + $0x78] sm:$0xff]
        %v319 = vld [vmem:[%s301 + $0x80] sm:$0xff]
        %v320 = vld [vmem:[%s301 + $0x88] sm:$0xff]
        %v321 = vld [vmem:[%s301 + $0x90] sm:$0xff]
        %v322 = vld [vmem:[%s301 + $0x98] sm:$0xff]
        %v323 = vld [vmem:[%s301 + $0xa0] sm:$0xff]
        %v324 = vld [vmem:[%s301 + $0xa8] sm:$0xff]
        %v325 = vld [vmem:[%s301 + $0xb0] sm:$0xff]
        %v326 = vld [vmem:[%s301 + $0xb8] sm:$0xff]
        %v327 = vld [vmem:[%s301 + $0xc0] sm:$0xff]
        %v328 = vld [vmem:[%s301 + $0xc8] sm:$0xff]
        %v329 = vld [vmem:[%s301 + $0xd0] sm:$0xff]
        %v330 = vld [vmem:[%s301 + $0xd8] sm:$0xff]
        %v331 = vld [vmem:[%s301 + $0xe0] sm:$0xff]
        %v332 = vld [vmem:[%s301 + $0xe8] sm:$0xff]
        %v333 = vld [vmem:[%s301 + $0xf0] sm:$0xff]
        %v334 = vld [vmem:[%s301 + $0xf8] sm:$0xff]
        %v335 = vpack.c.bf16 %v304, %v303
        %v336 = vpack.c.bf16 %v306, %v305
        %v337 = vpack.c.bf16 %v308, %v307
        %v338 = vpack.c.bf16 %v310, %v309
        %v339 = vpack.c.bf16 %v312, %v311
        %v340 = vpack.c.bf16 %v314, %v313
        %v341 = vpack.c.bf16 %v316, %v315
        %v342 = vpack.c.bf16 %v318, %v317
        %v343 = vpack.c.bf16 %v320, %v319
        %v344 = vpack.c.bf16 %v322, %v321
        %v345 = vpack.c.bf16 %v324, %v323
        %v346 = vpack.c.bf16 %v326, %v325
        %v347 = vpack.c.bf16 %v328, %v327
        %v348 = vpack.c.bf16 %v330, %v329
        %v349 = vpack.c.bf16 %v332, %v331
        %v350 = vpack.c.bf16 %v334, %v333
        %v351 = vld [vmem:[%s1] sm:$0xff]
        %v352 = vld [vmem:[%s1 + $0x8] sm:$0xff]
        %v353 = vld [vmem:[%s1 + $0x10] sm:$0xff]
        %v354 = vld [vmem:[%s1 + $0x18] sm:$0xff]
        %v355 = vld [vmem:[%s1 + $0x20] sm:$0xff]
        %v356 = vld [vmem:[%s1 + $0x28] sm:$0xff]
        %v357 = vld [vmem:[%s1 + $0x30] sm:$0xff]
        %v358 = vld [vmem:[%s1 + $0x38] sm:$0xff]
        %v359 = vld [vmem:[%s1 + $0x40] sm:$0xff]
        %v360 = vld [vmem:[%s1 + $0x48] sm:$0xff]
        %v361 = vld [vmem:[%s1 + $0x50] sm:$0xff]
        %v362 = vld [vmem:[%s1 + $0x58] sm:$0xff]
        %v363 = vld [vmem:[%s1 + $0x60] sm:$0xff]
        %v364 = vld [vmem:[%s1 + $0x68] sm:$0xff]
        %v365 = vld [vmem:[%s1 + $0x70] sm:$0xff]
        %v366 = vld [vmem:[%s1 + $0x78] sm:$0xff]
        %v367 = vld [vmem:[%s2] sm:$0xff]
        %v368 = vld [vmem:[%s2 + $0x8] sm:$0xff]
        %v369 = vld [vmem:[%s2 + $0x10] sm:$0xff]
        %v370 = vld [vmem:[%s2 + $0x18] sm:$0xff]
        %v371 = vld [vmem:[%s2 + $0x20] sm:$0xff]
        %v372 = vld [vmem:[%s2 + $0x28] sm:$0xff]
        %v373 = vld [vmem:[%s2 + $0x30] sm:$0xff]
        %v374 = vld [vmem:[%s2 + $0x38] sm:$0xff]
        %v375 = vld [vmem:[%s2 + $0x40] sm:$0xff]
        %v376 = vld [vmem:[%s2 + $0x48] sm:$0xff]
        %v377 = vld [vmem:[%s2 + $0x50] sm:$0xff]
        %v378 = vld [vmem:[%s2 + $0x58] sm:$0xff]
        %v379 = vld [vmem:[%s2 + $0x60] sm:$0xff]
        %v380 = vld [vmem:[%s2 + $0x68] sm:$0xff]
        %v381 = vld [vmem:[%s2 + $0x70] sm:$0xff]
        %v382 = vld [vmem:[%s2 + $0x78] sm:$0xff]
        %384 = vset.pattern.permute.xlu0 0
        %385 = vperm.xlu0 %384, %v367
        %v386 = vpop.permute.xlu0 %385
        %389 = vset.pattern.permute.xlu0 0
        %390 = vperm.xlu0 %389, %v368
        %v391 = vpop.permute.xlu0 %390
        %394 = vset.pattern.permute.xlu0 0
        %395 = vperm.xlu0 %394, %v369
        %v396 = vpop.permute.xlu0 %395
        %399 = vset.pattern.permute.xlu0 0
        %400 = vperm.xlu0 %399, %v370
        %v401 = vpop.permute.xlu0 %400
        %404 = vset.pattern.permute.xlu0 0
        %405 = vperm.xlu0 %404, %v371
        %v406 = vpop.permute.xlu0 %405
        %409 = vset.pattern.permute.xlu0 0
        %410 = vperm.xlu0 %409, %v372
        %v411 = vpop.permute.xlu0 %410
        %414 = vset.pattern.permute.xlu0 0
        %415 = vperm.xlu0 %414, %v373
        %v416 = vpop.permute.xlu0 %415
        %419 = vset.pattern.permute.xlu0 0
        %420 = vperm.xlu0 %419, %v374
        %v421 = vpop.permute.xlu0 %420
        %424 = vset.pattern.permute.xlu0 0
        %425 = vperm.xlu0 %424, %v375
        %v426 = vpop.permute.xlu0 %425
        %429 = vset.pattern.permute.xlu0 0
        %430 = vperm.xlu0 %429, %v376
        %v431 = vpop.permute.xlu0 %430
        %434 = vset.pattern.permute.xlu0 0
        %435 = vperm.xlu0 %434, %v377
        %v436 = vpop.permute.xlu0 %435
        %439 = vset.pattern.permute.xlu0 0
        %440 = vperm.xlu0 %439, %v378
        %v441 = vpop.permute.xlu0 %440
        %444 = vset.pattern.permute.xlu0 0
        %445 = vperm.xlu0 %444, %v379
        %v446 = vpop.permute.xlu0 %445
        %449 = vset.pattern.permute.xlu0 0
        %450 = vperm.xlu0 %449, %v380
        %v451 = vpop.permute.xlu0 %450
        %454 = vset.pattern.permute.xlu0 0
        %455 = vperm.xlu0 %454, %v381
        %v456 = vpop.permute.xlu0 %455
        %459 = vset.pattern.permute.xlu0 0
        %460 = vperm.xlu0 %459, %v382
        %v461 = vpop.permute.xlu0 %460
        %v479 = vunpack.c.l.b16 %v351
        %v480 = vunpack.c.h.b16 %v351
        %v481 = vunpack.c.l.b16 %v352
        %v482 = vunpack.c.h.b16 %v352
        %v483 = vunpack.c.l.b16 %v353
        %v484 = vunpack.c.h.b16 %v353
        %v485 = vunpack.c.l.b16 %v354
        %v486 = vunpack.c.h.b16 %v354
        %v487 = vunpack.c.l.b16 %v355
        %v488 = vunpack.c.h.b16 %v355
        %v489 = vunpack.c.l.b16 %v356
        %v490 = vunpack.c.h.b16 %v356
        %v491 = vunpack.c.l.b16 %v357
        %v492 = vunpack.c.h.b16 %v357
        %v493 = vunpack.c.l.b16 %v358
        %v494 = vunpack.c.h.b16 %v358
        %v495 = vunpack.c.l.b16 %v359
        %v496 = vunpack.c.h.b16 %v359
        %v497 = vunpack.c.l.b16 %v360
        %v498 = vunpack.c.h.b16 %v360
        %v499 = vunpack.c.l.b16 %v361
        %v500 = vunpack.c.h.b16 %v361
        %v501 = vunpack.c.l.b16 %v362
        %v502 = vunpack.c.h.b16 %v362
        %v503 = vunpack.c.l.b16 %v363
        %v504 = vunpack.c.h.b16 %v363
        %v505 = vunpack.c.l.b16 %v364
        %v506 = vunpack.c.h.b16 %v364
        %v507 = vunpack.c.l.b16 %v365
        %v508 = vunpack.c.h.b16 %v365
        %v509 = vunpack.c.l.b16 %v366
        %v510 = vunpack.c.h.b16 %v366
        %v511 = vpack.c.b16 %v481, %v479
        %v512 = vpack.c.b16 %v482, %v480
        %v513 = vpack.c.b16 %v485, %v483
        %v514 = vpack.c.b16 %v486, %v484
        %v515 = vpack.c.b16 %v489, %v487
        %v516 = vpack.c.b16 %v490, %v488
        %v517 = vpack.c.b16 %v493, %v491
        %v518 = vpack.c.b16 %v494, %v492
        %v519 = vpack.c.b16 %v497, %v495
        %v520 = vpack.c.b16 %v498, %v496
        %v521 = vpack.c.b16 %v501, %v499
        %v522 = vpack.c.b16 %v502, %v500
        %v523 = vpack.c.b16 %v505, %v503
        %v524 = vpack.c.b16 %v506, %v504
        %v525 = vpack.c.b16 %v509, %v507
        %v526 = vpack.c.b16 %v510, %v508
        %543 = vmatprep.subr.bf16.mxu0 0
        %544 = vmatpush1.bf16.msra.mxu0 %v335
        %545 = vmatprep.subr.bf16.mxu0 0
        %546 = vmatpush1.bf16.msra.mxu0 %v336
        %547 = vmatprep.subr.bf16.mxu0 0
        %548 = vmatpush1.bf16.msra.mxu0 %v337
        %549 = vmatprep.subr.bf16.mxu0 0
        %550 = vmatpush1.bf16.msra.mxu0 %v338
        %551 = vmatprep.subr.bf16.mxu0 0
        %552 = vmatpush1.bf16.msra.mxu0 %v339
        %553 = vmatprep.subr.bf16.mxu0 0
        %554 = vmatpush1.bf16.msra.mxu0 %v340
        %555 = vmatprep.subr.bf16.mxu0 0
        %556 = vmatpush1.bf16.msra.mxu0 %v341
        %557 = vmatprep.subr.bf16.mxu0 0
        %558 = vmatpush1.bf16.msra.mxu0 %v342
        %559 = vmatprep.subr.bf16.mxu0 0
        %560 = vmatpush1.bf16.msra.mxu0 %v343
        %561 = vmatprep.subr.bf16.mxu0 0
        %562 = vmatpush1.bf16.msra.mxu0 %v344
        %563 = vmatprep.subr.bf16.mxu0 0
        %564 = vmatpush1.bf16.msra.mxu0 %v345
        %565 = vmatprep.subr.bf16.mxu0 0
        %566 = vmatpush1.bf16.msra.mxu0 %v346
        %567 = vmatprep.subr.bf16.mxu0 0
        %568 = vmatpush1.bf16.msra.mxu0 %v347
        %569 = vmatprep.subr.bf16.mxu0 0
        %570 = vmatpush1.bf16.msra.mxu0 %v348
        %571 = vmatprep.subr.bf16.mxu0 0
        %572 = vmatpush1.bf16.msra.mxu0 %v349
        %573 = vmatprep.subr.bf16.mxu0 0
        %574 = vmatpush1.bf16.msra.mxu0 %v350
        %575 = vmatprep.mubr.bf16.mxu0 %v512
        %576 = vmatmul.mubr.bf16.gmra.mrb[0].mxu0 %v511
        %v577 = vpop.f32.mrb[0].mxu0
        %v578 = vadd.f32 %v386, %v577
        %v579 = vpop.f32.mrb[0].mxu0
        %v580 = vpop.f32.mrb[0].mxu0
        %v581 = vadd.f32 %v391, %v580
        %v582 = vpop.f32.mrb[0].mxu0
        %583 = vmatprep.mubr.bf16.mxu0 %v514
        %584 = vmatmul.mubr.bf16.gmra.mrb[0].mxu0 %v513
        %v585 = vpop.f32.mrb[0].mxu0
        %v586 = vadd.f32 %v396, %v585
        %v587 = vpop.f32.mrb[0].mxu0
        %v588 = vpop.f32.mrb[0].mxu0
        %v589 = vadd.f32 %v401, %v588
        %v590 = vpop.f32.mrb[0].mxu0
        %591 = vmatprep.mubr.bf16.mxu0 %v516
        %592 = vmatmul.mubr.bf16.gmra.mrb[0].mxu0 %v515
        %v593 = vpop.f32.mrb[0].mxu0
        %v594 = vadd.f32 %v406, %v593
        %v595 = vpop.f32.mrb[0].mxu0
        %v596 = vpop.f32.mrb[0].mxu0
        %v597 = vadd.f32 %v411, %v596
        %v598 = vpop.f32.mrb[0].mxu0
        %599 = vmatprep.mubr.bf16.mxu0 %v518
        %600 = vmatmul.mubr.bf16.gmra.mrb[0].mxu0 %v517
        %v601 = vpop.f32.mrb[0].mxu0
        %v602 = vadd.f32 %v416, %v601
        %v603 = vpop.f32.mrb[0].mxu0
        %v604 = vpop.f32.mrb[0].mxu0
        %v605 = vadd.f32 %v421, %v604
        %v606 = vpop.f32.mrb[0].mxu0
        %607 = vmatprep.mubr.bf16.mxu0 %v520
        %608 = vmatmul.mubr.bf16.gmra.mrb[0].mxu0 %v519
        %v609 = vpop.f32.mrb[0].mxu0
        %v610 = vadd.f32 %v426, %v609
        %v611 = vpop.f32.mrb[0].mxu0
        %v612 = vpop.f32.mrb[0].mxu0
        %v613 = vadd.f32 %v431, %v612
        %v614 = vpop.f32.mrb[0].mxu0
        %615 = vmatprep.mubr.bf16.mxu0 %v522
        %616 = vmatmul.mubr.bf16.gmra.mrb[0].mxu0 %v521
        %v617 = vpop.f32.mrb[0].mxu0
        %v618 = vadd.f32 %v436, %v617
        %v619 = vpop.f32.mrb[0].mxu0
        %v620 = vpop.f32.mrb[0].mxu0
        %v621 = vadd.f32 %v441, %v620
        %v622 = vpop.f32.mrb[0].mxu0
        %623 = vmatprep.mubr.bf16.mxu0 %v524
        %624 = vmatmul.mubr.bf16.gmra.mrb[0].mxu0 %v523
        %v625 = vpop.f32.mrb[0].mxu0
        %v626 = vadd.f32 %v446, %v625
        %v627 = vpop.f32.mrb[0].mxu0
        %v628 = vpop.f32.mrb[0].mxu0
        %v629 = vadd.f32 %v451, %v628
        %v630 = vpop.f32.mrb[0].mxu0
        %631 = vmatprep.mubr.bf16.mxu0 %v526
        %632 = vmatmul.mubr.bf16.gmra.mrb[0].mxu0 %v525
        %v633 = vpop.f32.mrb[0].mxu0
        %v634 = vadd.f32 %v456, %v633
        %v635 = vpop.f32.mrb[0].mxu0
        %v636 = vpop.f32.mrb[0].mxu0
        %v637 = vadd.f32 %v461, %v636
        %v638 = vpop.f32.mrb[0].mxu0
        %639 = vdwg.mxu0
        %v640 = vmax.f32 %v578, 0.0
        %v641 = vmax.f32 %v581, 0.0
        %v642 = vmax.f32 %v586, 0.0
        %v643 = vmax.f32 %v589, 0.0
        %v644 = vmax.f32 %v594, 0.0
        %v645 = vmax.f32 %v597, 0.0
        %v646 = vmax.f32 %v602, 0.0
        %v647 = vmax.f32 %v605, 0.0
        %v648 = vmax.f32 %v610, 0.0
        %v649 = vmax.f32 %v613, 0.0
        %v650 = vmax.f32 %v618, 0.0
        %v651 = vmax.f32 %v621, 0.0
        %v652 = vmax.f32 %v626, 0.0
        %v653 = vmax.f32 %v629, 0.0
        %v654 = vmax.f32 %v634, 0.0
        %v655 = vmax.f32 %v637, 0.0
        %v656 = vpack.c.bf16 %v641, %v640
        %v657 = vpack.c.bf16 %v643, %v642
        %v658 = vpack.c.bf16 %v645, %v644
        %v659 = vpack.c.bf16 %v647, %v646
        %v660 = vpack.c.bf16 %v649, %v648
        %v661 = vpack.c.bf16 %v651, %v650
        %v662 = vpack.c.bf16 %v653, %v652
        %v663 = vpack.c.bf16 %v655, %v654
        %v664 = vld [vmem:[%s3] sm:$0xf]
        %v665 = vld [vmem:[%s3 + $0x4] sm:$0xf]
        %v666 = vld [vmem:[%s3 + $0x8] sm:$0xf]
        %v667 = vld [vmem:[%s3 + $0xc] sm:$0xf]
        %v668 = vld [vmem:[%s3 + $0x10] sm:$0xf]
        %v669 = vld [vmem:[%s3 + $0x14] sm:$0xf]
        %v670 = vld [vmem:[%s3 + $0x18] sm:$0xf]
        %v671 = vld [vmem:[%s3 + $0x1c] sm:$0xf]
        %v672 = vld [vmem:[%s3 + $0x20] sm:$0xf]
        %v673 = vld [vmem:[%s3 + $0x24] sm:$0xf]
        %v674 = vld [vmem:[%s3 + $0x28] sm:$0xf]
        %v675 = vld [vmem:[%s3 + $0x2c] sm:$0xf]
        %v676 = vld [vmem:[%s3 + $0x30] sm:$0xf]
        %v677 = vld [vmem:[%s3 + $0x34] sm:$0xf]
        %v678 = vld [vmem:[%s3 + $0x38] sm:$0xf]
        %v679 = vld [vmem:[%s3 + $0x3c] sm:$0xf]
        %v680 = vld [vmem:[%s4] sm:$0xff]
        %v681 = vld [vmem:[%s4 + $0x8] sm:$0xff]
        %v682 = vld [vmem:[%s4 + $0x10] sm:$0xff]
        %v683 = vld [vmem:[%s4 + $0x18] sm:$0xff]
        %v684 = vld [vmem:[%s4 + $0x20] sm:$0xff]
        %v685 = vld [vmem:[%s4 + $0x28] sm:$0xff]
        %v686 = vld [vmem:[%s4 + $0x30] sm:$0xff]
        %v687 = vld [vmem:[%s4 + $0x38] sm:$0xff]
        %v688 = vld [vmem:[%s4 + $0x40] sm:$0xff]
        %v689 = vld [vmem:[%s4 + $0x48] sm:$0xff]
        %v690 = vld [vmem:[%s4 + $0x50] sm:$0xff]
        %v691 = vld [vmem:[%s4 + $0x58] sm:$0xff]
        %v692 = vld [vmem:[%s4 + $0x60] sm:$0xff]
        %v693 = vld [vmem:[%s4 + $0x68] sm:$0xff]
        %v694 = vld [vmem:[%s4 + $0x70] sm:$0xff]
        %v695 = vld [vmem:[%s4 + $0x78] sm:$0xff]
        %697 = vset.pattern.permute.xlu0 0
        %698 = vperm.xlu0 %697, %v680
        %v699 = vpop.permute.xlu0 %698
        %702 = vset.pattern.permute.xlu0 0
        %703 = vperm.xlu0 %702, %v681
        %v704 = vpop.permute.xlu0 %703
        %707 = vset.pattern.permute.xlu0 0
        %708 = vperm.xlu0 %707, %v682
        %v709 = vpop.permute.xlu0 %708
        %712 = vset.pattern.permute.xlu0 0
        %713 = vperm.xlu0 %712, %v683
        %v714 = vpop.permute.xlu0 %713
        %717 = vset.pattern.permute.xlu0 0
        %718 = vperm.xlu0 %717, %v684
        %v719 = vpop.permute.xlu0 %718
        %722 = vset.pattern.permute.xlu0 0
        %723 = vperm.xlu0 %722, %v685
        %v724 = vpop.permute.xlu0 %723
        %727 = vset.pattern.permute.xlu0 0
        %728 = vperm.xlu0 %727, %v686
        %v729 = vpop.permute.xlu0 %728
        %732 = vset.pattern.permute.xlu0 0
        %733 = vperm.xlu0 %732, %v687
        %v734 = vpop.permute.xlu0 %733
        %737 = vset.pattern.permute.xlu0 0
        %738 = vperm.xlu0 %737, %v688
        %v739 = vpop.permute.xlu0 %738
        %742 = vset.pattern.permute.xlu0 0
        %743 = vperm.xlu0 %742, %v689
        %v744 = vpop.permute.xlu0 %743
        %747 = vset.pattern.permute.xlu0 0
        %748 = vperm.xlu0 %747, %v690
        %v749 = vpop.permute.xlu0 %748
        %752 = vset.pattern.permute.xlu0 0
        %753 = vperm.xlu0 %752, %v691
        %v754 = vpop.permute.xlu0 %753
        %757 = vset.pattern.permute.xlu0 0
        %758 = vperm.xlu0 %757, %v692
        %v759 = vpop.permute.xlu0 %758
        %762 = vset.pattern.permute.xlu0 0
        %763 = vperm.xlu0 %762, %v693
        %v764 = vpop.permute.xlu0 %763
        %767 = vset.pattern.permute.xlu0 0
        %768 = vperm.xlu0 %767, %v694
        %v769 = vpop.permute.xlu0 %768
        %772 = vset.pattern.permute.xlu0 0
        %773 = vperm.xlu0 %772, %v695
        %v774 = vpop.permute.xlu0 %773
        %v792 = vunpack.c.l.b16 %v664
        %v793 = vunpack.c.l.b16 %v665
        %v794 = vunpack.c.l.b16 %v666
        %v795 = vunpack.c.l.b16 %v667
        %v796 = vunpack.c.l.b16 %v668
        %v797 = vunpack.c.l.b16 %v669
        %v798 = vunpack.c.l.b16 %v670
        %v799 = vunpack.c.l.b16 %v671
        %v800 = vunpack.c.l.b16 %v672
        %v801 = vunpack.c.l.b16 %v673
        %v802 = vunpack.c.l.b16 %v674
        %v803 = vunpack.c.l.b16 %v675
        %v804 = vunpack.c.l.b16 %v676
        %v805 = vunpack.c.l.b16 %v677
        %v806 = vunpack.c.l.b16 %v678
        %v807 = vunpack.c.l.b16 %v679
        %v808 = vpack.c.b16 %v793, %v792
        %v809 = vpack.c.b16 %v795, %v794
        %v810 = vpack.c.b16 %v797, %v796
        %v811 = vpack.c.b16 %v799, %v798
        %v812 = vpack.c.b16 %v801, %v800
        %v813 = vpack.c.b16 %v803, %v802
        %v814 = vpack.c.b16 %v805, %v804
        %v815 = vpack.c.b16 %v807, %v806
        %824 = vmatprep.subr.bf16.mxu0 0
        %825 = vmatpush1.bf16.msra.mxu0 %v656
        %826 = vmatprep.subr.bf16.mxu0 0
        %827 = vmatpush1.bf16.msra.mxu0 %v657
        %828 = vmatprep.subr.bf16.mxu0 0
        %829 = vmatpush1.bf16.msra.mxu0 %v658
        %830 = vmatprep.subr.bf16.mxu0 0
        %831 = vmatpush1.bf16.msra.mxu0 %v659
        %832 = vmatprep.subr.bf16.mxu0 0
        %833 = vmatpush1.bf16.msra.mxu0 %v660
        %834 = vmatprep.subr.bf16.mxu0 0
        %835 = vmatpush1.bf16.msra.mxu0 %v661
        %836 = vmatprep.subr.bf16.mxu0 0
        %837 = vmatpush1.bf16.msra.mxu0 %v662
        %838 = vmatprep.subr.bf16.mxu0 0
        %839 = vmatpush1.bf16.msra.mxu0 %v663
        %840 = vmatprep.subr.bf16.mxu0 0
        %841 = vmatpush1.bf16.msra.mxu0 0
        %842 = vmatprep.subr.bf16.mxu0 0
        %843 = vmatpush1.bf16.msra.mxu0 0
        %844 = vmatprep.subr.bf16.mxu0 0
        %845 = vmatpush1.bf16.msra.mxu0 0
        %846 = vmatprep.subr.bf16.mxu0 0
        %847 = vmatpush1.bf16.msra.mxu0 0
        %848 = vmatprep.subr.bf16.mxu0 0
        %849 = vmatpush1.bf16.msra.mxu0 0
        %850 = vmatprep.subr.bf16.mxu0 0
        %851 = vmatpush1.bf16.msra.mxu0 0
        %852 = vmatprep.subr.bf16.mxu0 0
        %853 = vmatpush1.bf16.msra.mxu0 0
        %854 = vmatprep.subr.bf16.mxu0 0
        %855 = vmatpush1.bf16.msra.mxu0 0
        %856 = vmatprep.mubr.bf16.mxu0 0
        %857 = vmatmul.mubr.bf16.gmra.mrb[0].mxu0 %v808
        %v858 = vpop.f32.mrb[0].mxu0
        %v859 = vadd.f32 %v699, %v858
        %v860 = vpop.f32.mrb[0].mxu0
        %v861 = vpop.f32.mrb[0].mxu0
        %v862 = vadd.f32 %v704, %v861
        %v863 = vpop.f32.mrb[0].mxu0
        %864 = vmatprep.mubr.bf16.mxu0 0
        %865 = vmatmul.mubr.bf16.gmra.mrb[0].mxu0 %v809
        %v866 = vpop.f32.mrb[0].mxu0
        %v867 = vadd.f32 %v709, %v866
        %v868 = vpop.f32.mrb[0].mxu0
        %v869 = vpop.f32.mrb[0].mxu0
        %v870 = vadd.f32 %v714, %v869
        %v871 = vpop.f32.mrb[0].mxu0
        %872 = vmatprep.mubr.bf16.mxu0 0
        %873 = vmatmul.mubr.bf16.gmra.mrb[0].mxu0 %v810
        %v874 = vpop.f32.mrb[0].mxu0
        %v875 = vadd.f32 %v719, %v874
        %v876 = vpop.f32.mrb[0].mxu0
        %v877 = vpop.f32.mrb[0].mxu0
        %v878 = vadd.f32 %v724, %v877
        %v879 = vpop.f32.mrb[0].mxu0
        %880 = vmatprep.mubr.bf16.mxu0 0
        %881 = vmatmul.mubr.bf16.gmra.mrb[0].mxu0 %v811
        %v882 = vpop.f32.mrb[0].mxu0
        %v883 = vadd.f32 %v729, %v882
        %v884 = vpop.f32.mrb[0].mxu0
        %v885 = vpop.f32.mrb[0].mxu0
        %v886 = vadd.f32 %v734, %v885
        %v887 = vpop.f32.mrb[0].mxu0
        %888 = vmatprep.mubr.bf16.mxu0 0
        %889 = vmatmul.mubr.bf16.gmra.mrb[0].mxu0 %v812
        %v890 = vpop.f32.mrb[0].mxu0
        %v891 = vadd.f32 %v739, %v890
        %v892 = vpop.f32.mrb[0].mxu0
        %v893 = vpop.f32.mrb[0].mxu0
        %v894 = vadd.f32 %v744, %v893
        %v895 = vpop.f32.mrb[0].mxu0
        %896 = vmatprep.mubr.bf16.mxu0 0
        %897 = vmatmul.mubr.bf16.gmra.mrb[0].mxu0 %v813
        %v898 = vpop.f32.mrb[0].mxu0
        %v899 = vadd.f32 %v749, %v898
        %v900 = vpop.f32.mrb[0].mxu0
        %v901 = vpop.f32.mrb[0].mxu0
        %v902 = vadd.f32 %v754, %v901
        %v903 = vpop.f32.mrb[0].mxu0
        %904 = vmatprep.mubr.bf16.mxu0 0
        %905 = vmatmul.mubr.bf16.gmra.mrb[0].mxu0 %v814
        %v906 = vpop.f32.mrb[0].mxu0
        %v907 = vadd.f32 %v759, %v906
        %v908 = vpop.f32.mrb[0].mxu0
        %v909 = vpop.f32.mrb[0].mxu0
        %v910 = vadd.f32 %v764, %v909
        %v911 = vpop.f32.mrb[0].mxu0
        %912 = vmatprep.mubr.bf16.mxu0 0
        %913 = vmatmul.mubr.bf16.gmra.mrb[0].mxu0 %v815
        %v914 = vpop.f32.mrb[0].mxu0
        %v915 = vadd.f32 %v769, %v914
        %v916 = vpop.f32.mrb[0].mxu0
        %v917 = vpop.f32.mrb[0].mxu0
        %v918 = vadd.f32 %v774, %v917
        %v919 = vpop.f32.mrb[0].mxu0
        %920 = vdwg.mxu0
        %v921 = vmax.f32 %v859, 0.0
        %v922 = vmax.f32 %v862, 0.0
        %v923 = vmax.f32 %v867, 0.0
        %v924 = vmax.f32 %v870, 0.0
        %v925 = vmax.f32 %v875, 0.0
        %v926 = vmax.f32 %v878, 0.0
        %v927 = vmax.f32 %v883, 0.0
        %v928 = vmax.f32 %v886, 0.0
        %v929 = vmax.f32 %v891, 0.0
        %v930 = vmax.f32 %v894, 0.0
        %v931 = vmax.f32 %v899, 0.0
        %v932 = vmax.f32 %v902, 0.0
        %v933 = vmax.f32 %v907, 0.0
        %v934 = vmax.f32 %v910, 0.0
        %v935 = vmax.f32 %v915, 0.0
        %v936 = vmax.f32 %v918, 0.0
        %v937 = vpack.c.bf16 %v922, %v921
        %v938 = vpack.c.bf16 %v924, %v923
        %v939 = vpack.c.bf16 %v926, %v925
        %v940 = vpack.c.bf16 %v928, %v927
        %v941 = vpack.c.bf16 %v930, %v929
        %v942 = vpack.c.bf16 %v932, %v931
        %v943 = vpack.c.bf16 %v934, %v933
        %v944 = vpack.c.bf16 %v936, %v935
        %v945 = vld [vmem:[%s5] sm:$0xf]
        %v946 = vld [vmem:[%s5 + $0x4] sm:$0xf]
        %v947 = vld [vmem:[%s5 + $0x8] sm:$0xf]
        %v948 = vld [vmem:[%s5 + $0xc] sm:$0xf]
        %v949 = vld [vmem:[%s5 + $0x10] sm:$0xf]
        %v950 = vld [vmem:[%s5 + $0x14] sm:$0xf]
        %v951 = vld [vmem:[%s6] sm:$0xff]
        %v952 = vld [vmem:[%s6 + $0x8] sm:$0xff]
        %v953 = vld [vmem:[%s6 + $0x10] sm:$0xff]
        %v954 = vld [vmem:[%s6 + $0x18] sm:$0xff]
        %v955 = vld [vmem:[%s6 + $0x20] sm:$0xff]
        %v956 = vld [vmem:[%s6 + $0x28] sm:$0xff]
        %958 = vset.pattern.permute.xlu0 0
        %959 = vperm.xlu0 %958, %v951
        %v960 = vpop.permute.xlu0 %959
        %963 = vset.pattern.permute.xlu0 0
        %964 = vperm.xlu0 %963, %v952
        %v965 = vpop.permute.xlu0 %964
        %968 = vset.pattern.permute.xlu0 0
        %969 = vperm.xlu0 %968, %v953
        %v970 = vpop.permute.xlu0 %969
        %973 = vset.pattern.permute.xlu0 0
        %974 = vperm.xlu0 %973, %v954
        %v975 = vpop.permute.xlu0 %974
        %978 = vset.pattern.permute.xlu0 0
        %979 = vperm.xlu0 %978, %v955
        %v980 = vpop.permute.xlu0 %979
        %983 = vset.pattern.permute.xlu0 0
        %984 = vperm.xlu0 %983, %v956
        %v985 = vpop.permute.xlu0 %984
        %v993 = vunpack.c.l.b16 %v945
        %v994 = vunpack.c.l.b16 %v946
        %v995 = vunpack.c.l.b16 %v947
        %v996 = vunpack.c.l.b16 %v948
        %v997 = vunpack.c.l.b16 %v949
        %v998 = vunpack.c.l.b16 %v950
        %v999 = vpack.c.b16 %v994, %v993
        %v1000 = vpack.c.b16 %v996, %v995
        %v1001 = vpack.c.b16 %v998, %v997
        %1005 = vmatprep.subr.bf16.mxu0 0
        %1006 = vmatpush1.bf16.msra.mxu0 %v937
        %1007 = vmatprep.subr.bf16.mxu0 0
        %1008 = vmatpush1.bf16.msra.mxu0 %v938
        %1009 = vmatprep.subr.bf16.mxu0 0
        %1010 = vmatpush1.bf16.msra.mxu0 %v939
        %1011 = vmatprep.subr.bf16.mxu0 0
        %1012 = vmatpush1.bf16.msra.mxu0 %v940
        %1013 = vmatprep.subr.bf16.mxu0 0
        %1014 = vmatpush1.bf16.msra.mxu0 %v941
        %1015 = vmatprep.subr.bf16.mxu0 0
        %1016 = vmatpush1.bf16.msra.mxu0 %v942
        %1017 = vmatprep.subr.bf16.mxu0 0
        %1018 = vmatpush1.bf16.msra.mxu0 %v943
        %1019 = vmatprep.subr.bf16.mxu0 0
        %1020 = vmatpush1.bf16.msra.mxu0 %v944
        %1021 = vmatprep.subr.bf16.mxu0 0
        %1022 = vmatpush1.bf16.msra.mxu0 0
        %1023 = vmatprep.subr.bf16.mxu0 0
        %1024 = vmatpush1.bf16.msra.mxu0 0
        %1025 = vmatprep.subr.bf16.mxu0 0
        %1026 = vmatpush1.bf16.msra.mxu0 0
        %1027 = vmatprep.subr.bf16.mxu0 0
        %1028 = vmatpush1.bf16.msra.mxu0 0
        %1029 = vmatprep.subr.bf16.mxu0 0
        %1030 = vmatpush1.bf16.msra.mxu0 0
        %1031 = vmatprep.subr.bf16.mxu0 0
        %1032 = vmatpush1.bf16.msra.mxu0 0
        %1033 = vmatprep.subr.bf16.mxu0 0
        %1034 = vmatpush1.bf16.msra.mxu0 0
        %1035 = vmatprep.subr.bf16.mxu0 0
        %1036 = vmatpush1.bf16.msra.mxu0 0
        %1037 = vmatprep.mubr.bf16.mxu0 0
        %1038 = vmatmul.mubr.bf16.gmra.mrb[0].mxu0 %v999
        %v1039 = vpop.f32.mrb[0].mxu0
        %v1040 = vadd.f32 %v960, %v1039
        %v1041 = vpop.f32.mrb[0].mxu0
        %v1042 = vpop.f32.mrb[0].mxu0
        %v1043 = vadd.f32 %v965, %v1042
        %v1044 = vpop.f32.mrb[0].mxu0
        %1045 = vmatprep.mubr.bf16.mxu0 0
        %1046 = vmatmul.mubr.bf16.gmra.mrb[0].mxu0 %v1000
        %v1047 = vpop.f32.mrb[0].mxu0
        %v1048 = vadd.f32 %v970, %v1047
        %v1049 = vpop.f32.mrb[0].mxu0
        %v1050 = vpop.f32.mrb[0].mxu0
        %v1051 = vadd.f32 %v975, %v1050
        %v1052 = vpop.f32.mrb[0].mxu0
        %1053 = vmatprep.mubr.bf16.mxu0 0
        %1054 = vmatmul.mubr.bf16.gmra.mrb[0].mxu0 %v1001
        %v1055 = vpop.f32.mrb[0].mxu0
        %v1056 = vadd.f32 %v980, %v1055
        %v1057 = vpop.f32.mrb[0].mxu0
        %v1058 = vpop.f32.mrb[0].mxu0
        %v1059 = vadd.f32 %v985, %v1058
        %v1060 = vpop.f32.mrb[0].mxu0
        %1061 = vdwg.mxu0
        %vm1062 = vcmask 523264
        %1063 = vst.msk [vmem:[%s293] sm:$0xff] %vm1062, %v1040
        %1064 = vst.msk [vmem:[%s293 + $0x8] sm:$0xff] %vm1062, %v1043
        %1065 = vst.msk [vmem:[%s293 + $0x10] sm:$0xff] %vm1062, %v1048
        %1066 = vst.msk [vmem:[%s293 + $0x18] sm:$0xff] %vm1062, %v1051
        %1067 = vst.msk [vmem:[%s293 + $0x20] sm:$0xff] %vm1062, %v1056
        %1068 = vst.msk [vmem:[%s293 + $0x28] sm:$0xff] %vm1062, %v1059
        %s1069 = sand.u32 %s197, 1
        %s1070 = scalar_lea.sflag [#allocation3], %s1069
        %s1071 = sand.u32 %s197, 1
        %s1072 = smul.addr %s1071, 48
        %s1073 = scalar_lea.vmem [#allocation2], %s1072
        // Predicated region
        $region49: #{tpu_custom_call.1} parent=47 // pred_check
          %p1074 = pneg %p207
        $region50: #{tpu_custom_call.1} parent=47 // pred_check_branch
          %1076 = sbr.rel (%p1074) target = $region52
        $region51: #{tpu_custom_call.1} parent=47 // pred_region
          %s1078 = ssub.s32 768, 768
          %1079 = vsyncadd %s1070, %s1078
          %s1080 = smul.addr %s25, 6
          %s1081 = sadd.s32 %s26, %s1080
          %s1082 = smul.addr %s1081, 128
          %s1083 = scalar_lea.hbm %s7, %s1082
          %s1084 = sshll.u32 %s1073, 4
          %s1085 = int_to_ptr.vmem [resolvable:$true] %s1084
          %1090 = dma.vmem_to_hbm [thread:$0]  %s1085, 768, %s1083, %s1070, 128, 128, 8
        $region52: #{tpu_custom_call.1} parent=47 // pred_fallthru
          _
      $region48: #{tpu_custom_call.1} parent=5 // pred_fallthru
        _
      %p1091 = scmp.le.s32.totalorder 2, %s16
      // Predicated region
      $region53: #{tpu_custom_call.1} parent=5 // pred_check
        %p1092 = pneg %p1091
      $region54: #{tpu_custom_call.1} parent=5 // pred_check_branch
        %1094 = sbr.rel (%p1092) target = $region56
      $region55: #{tpu_custom_call.1} parent=5 // pred_region
        %s1095 = ssub.s32 %s16, 2
        // Predicated region
        $region57: #{tpu_custom_call.1} parent=55 // pred_check
          %p1096 = pneg %p213
        $region58: #{tpu_custom_call.1} parent=55 // pred_check_branch
          %1098 = sbr.rel (%p1096) target = $region60
        $region59: #{tpu_custom_call.1} parent=55 // pred_region
          %s1099 = sand.u32 %s198, 1
          %s1100 = scalar_lea.sflag [#allocation3], %s1099
          %s1101 = sand.u32 %s198, 1
          %s1102 = smul.addr %s1101, 48
          %s1103 = scalar_lea.vmem [#allocation2], %s1102
          %1104 = dma.done %s1100, 768
        $region60: #{tpu_custom_call.1} parent=55 // pred_fallthru
          _
      $region56: #{tpu_custom_call.1} parent=5 // pred_fallthru
        _
    $region6: #{tpu_custom_call.1} parent=1 // loop_footer
      %s20 = sadd.s32 1, %s16
    $region7: #{tpu_custom_call.1} parent=1 // loop_footer_branch
      %15 = sbr.rel target = $region3
    $region8: #{tpu_custom_call.1} parent=1 // loop_exit
      _
    %1105 = vsyncpa [#allocation3], 1
    %s1106 = scalar_lea.sflag [#allocation3], 1
    %1107 = vsyncpa %s1106, 1

</llo_original>
